<compile_context>
chip_gen: v7x
topology: tpu7x:2x2x1
jax: 0.10.0
libtpu: 0.0.40
codegen_flags: <defaults>
</compile_context>

<pallas_src>
import jax
import jax.numpy as jnp
from jax.experimental import pallas as pl
from jax.experimental.pallas import tpu as pltpu

NUM_INPUTS = 784      # 1 * 28 * 28
NUM_OUTPUTS = 10
TB_MAX = 2048         # batch-tile cap; 2 x (2048*784*4B) ~ 12.8 MiB double-buffered
MIN_TILE = 8          # sublane granularity


def _cdiv(a, b):
    return -(-a // b)


def _round_up(n, m):
    return _cdiv(n, m) * m


def _batch_tiling(batch):
    """Pick (tile, padded_batch). Small batches use one full-extent block."""
    if batch <= 2 * MIN_TILE:
        return batch, batch                       # block == full dim, no padding
    # >= 2 grid steps so the "parallel" axis can shard across v7x's 2 TCs;
    # otherwise as few tiles as TB_MAX allows (amortizes ~0.35us per-step cost).
    n_tiles = max(_cdiv(batch, TB_MAX), 2)
    tile = _round_up(_cdiv(batch, n_tiles), MIN_TILE)
    return tile, n_tiles * tile


def linear_kernel(x_ref, wt_ref, b_ref, o_ref):
    # x_ref: (tb, 784) f32 | wt_ref: (784, 10) f32 | b_ref: (1, 10) f32
    # o_ref: (tb, 10) f32
    x = x_ref[...].astype(jnp.bfloat16)           # free VPU cast under the DMA
    w = wt_ref[...].astype(jnp.bfloat16)
    acc = jnp.dot(x, w, preferred_element_type=jnp.float32)   # f32 MXU accumulation
    o_ref[...] = acc + b_ref[...]                 # f32 bias epilogue


def prepare_params(weight, bias):
    """One-time param prep (hoisted out of the per-call hot path)."""
    wt = jnp.asarray(weight, jnp.float32).T                    # (784, 10)
    b2 = jnp.asarray(bias, jnp.float32).reshape(1, NUM_OUTPUTS)
    return wt, b2


def linear_forward(x, wt, b2):
    """x: (B, C, H, W) f32; wt: (784, 10); b2: (1, 10) -> (B, 10) f32."""
    batch = x.shape[0]
    x_flat = x.reshape(batch, -1)                 # free metadata reshape (glue)

    tb, b_pad = _batch_tiling(batch)
    if b_pad != batch:                            # rare; at most a few rows
        x_flat = jnp.pad(x_flat, ((0, b_pad - batch), (0, 0)))

    grid = (b_pad // tb,)
    out = pl.pallas_call(
        linear_kernel,
        out_shape=jax.ShapeDtypeStruct((b_pad, NUM_OUTPUTS), jnp.float32),
        grid_spec=pl.GridSpec(
            grid=grid,
            in_specs=[
                # x tiles stream (double-buffered). If profiling ever shows
                # exposed DMA at tile edges, add pipeline_mode=pl.Buffered(3).
                pl.BlockSpec((tb, NUM_INPUTS), lambda i: (i, 0)),
                pl.BlockSpec((NUM_INPUTS, NUM_OUTPUTS), lambda i: (0, 0)),  # W^T resident
                pl.BlockSpec((1, NUM_OUTPUTS), lambda i: (0, 0)),           # bias resident
            ],
            out_specs=pl.BlockSpec((tb, NUM_OUTPUTS), lambda i: (i, 0)),
        ),
        compiler_params=pltpu.CompilerParams(
            dimension_semantics=("parallel",),     # shard batch across TCs on v7x
            vmem_limit_bytes=32 * 1024 * 1024,     # headroom for tb=2048 f32 tiles
        ),
    )(x_flat, wt, b2)

    return out[:batch] if b_pad != batch else out


def init_params(key, num_inputs, num_outputs):
    # Mimics nn.Linear default init: U(-1/sqrt(fan_in), 1/sqrt(fan_in)).
    kw, kb = jax.random.split(key)
    bound = 1.0 / jnp.sqrt(jnp.float32(num_inputs))
    weight = jax.random.uniform(
        kw, (num_outputs, num_inputs), jnp.float32, -bound, bound)
    bias = jax.random.uniform(
        kb, (num_outputs,), jnp.float32, -bound, bound)
    return weight, bias


if __name__ == "__main__":
    key = jax.random.PRNGKey(0)
    kx, kp, kx2 = jax.random.split(key, 3)

    weight, bias = init_params(kp, NUM_INPUTS, NUM_OUTPUTS)
    wt, b2 = prepare_params(weight, bias)          # hoisted one-time prep

    # MNIST-like input consistent with num_inputs=784: (B=2, C=1, H=28, W=28)
    x = jax.random.normal(kx, (2, 1, 28, 28), jnp.float32)
    y = linear_forward(x, wt, b2)
    jax.block_until_ready(y)

    y_ref = x.reshape(x.shape[0], -1) @ weight.T + bias
    assert y.shape == (2, NUM_OUTPUTS)
    assert jnp.allclose(y, y_ref, atol=2e-2, rtol=2e-2), (
        f"max abs err {jnp.max(jnp.abs(y - y_ref))}")

    # Also exercise the multi-tile (grid >= 2, padded) path.
    x2 = jax.random.normal(kx2, (20, 1, 28, 28), jnp.float32)
    y2 = linear_forward(x2, wt, b2)
    jax.block_until_ready(y2)
    y2_ref = x2.reshape(20, -1) @ weight.T + bias
    assert y2.shape == (20, NUM_OUTPUTS)
    assert jnp.allclose(y2, y2_ref, atol=2e-2, rtol=2e-2), (
        f"max abs err {jnp.max(jnp.abs(y2 - y2_ref))}")

    print("KERNEL_OK")
</pallas_src>

<mosaic_0001>
module attributes {stable_mosaic.version = 11 : i64} {
  func.func @linear_kernel(%arg0: i32, %arg1: memref<2x784xf32, #tpu.memory_space<vmem>>, %arg2: memref<784x10xf32, #tpu.memory_space<vmem>>, %arg3: memref<1x10xf32, #tpu.memory_space<vmem>>, %arg4: memref<2x10xf32, #tpu.memory_space<vmem>>) attributes {dimension_semantics = [#tpu.dimension_semantics<parallel>], iteration_bounds = array<i64: 1>, scalar_prefetch = 0 : i64, scratch_operands = 0 : i64, tpu.core_type = #tpu.core_type<tc>, window_params = [{transform_indices = @transform_0, window_bounds = array<i64: 2, 784>}, {pipeline_mode = #tpu.pipeline_mode<synchronous>, transform_indices = @transform_1, window_bounds = array<i64: 784, 10>}, {pipeline_mode = #tpu.pipeline_mode<synchronous>, transform_indices = @transform_2, window_bounds = array<i64: 1, 10>}, {transform_indices = @transform_3, window_bounds = array<i64: 2, 10>}]} {
    %c0 = arith.constant 0 : index
    %c0_0 = arith.constant 0 : index
    %0 = vector.load %arg1[%c0, %c0_0] : memref<2x784xf32, #tpu.memory_space<vmem>>, vector<2x784xf32>
    %1 = arith.truncf %0 : vector<2x784xf32> to vector<2x784xbf16>
    %c0_1 = arith.constant 0 : index
    %c0_2 = arith.constant 0 : index
    %2 = vector.load %arg2[%c0_1, %c0_2] : memref<784x10xf32, #tpu.memory_space<vmem>>, vector<784x10xf32>
    %3 = arith.truncf %2 : vector<784x10xf32> to vector<784x10xbf16>
    %cst = arith.constant dense<0.000000e+00> : vector<2x10xf32>
    %4 = tpu.matmul %1, %3, %cst {dimension_numbers = #tpu.dot_dimension_numbers<[1], [0], [0], [1], [0, 0, 1, 1], [], []>} : vector<2x784xbf16>, vector<784x10xbf16>, vector<2x10xf32> -> vector<2x10xf32>
    %c0_3 = arith.constant 0 : index
    %c0_4 = arith.constant 0 : index
    %5 = vector.load %arg3[%c0_3, %c0_4] : memref<1x10xf32, #tpu.memory_space<vmem>>, vector<1x10xf32>
    %6 = vector.broadcast %5 : vector<1x10xf32> to vector<2x10xf32>
    %7 = arith.addf %4, %6 : vector<2x10xf32>
    %c0_5 = arith.constant 0 : index
    %c0_6 = arith.constant 0 : index
    %8 = vector.load %arg4[%c0_5, %c0_6] : memref<2x10xf32, #tpu.memory_space<vmem>>, vector<2x10xf32>
    tpu.vector_store %arg4[%c0_5, %c0_6], %7 {strides = array<i32>} : memref<2x10xf32, #tpu.memory_space<vmem>>, vector<2x10xf32>,
    return
  }
  func.func @transform_0(%arg0: i32) -> (i32, i32) {
    %c0_i32 = arith.constant 0 : i32
    %c0_i32_0 = arith.constant 0 : i32
    return %arg0, %c0_i32 : i32, i32
  }
  func.func @transform_1(%arg0: i32) -> (i32, i32) {
    %c0_i32 = arith.constant 0 : i32
    %c0_i32_0 = arith.constant 0 : i32
    %c0_i32_1 = arith.constant 0 : i32
    return %c0_i32, %c0_i32_0 : i32, i32
  }
  func.func @transform_2(%arg0: i32) -> (i32, i32) {
    %c0_i32 = arith.constant 0 : i32
    %c0_i32_0 = arith.constant 0 : i32
    %c0_i32_1 = arith.constant 0 : i32
    return %c0_i32, %c0_i32_0 : i32, i32
  }
  func.func @transform_3(%arg0: i32) -> (i32, i32) {
    %c0_i32 = arith.constant 0 : i32
    %c0_i32_0 = arith.constant 0 : i32
    return %arg0, %c0_i32 : i32, i32
  }
}

</mosaic_0001>

<llo_original>
// kernel: tpu_custom_call.1
$region0: #{tpu_custom_call.1}
  #allocation0 [shape = 'u32[]', space=smem, size = 0x4, offset = 0x4, fixed_abs, tag = 'smem constant byte address 0x4 - core index']
  #allocation1 [shape = 'u32[144,128]{1,0:T(1,128)}', space=vmem, size = 0x12000, scoped, tag = 'internal scratch']
  %s0 = inlined_call_operand.vmem [shape: f32[2,784], index: 0, kind: input, shape index: {}]
  %s1 = inlined_call_operand.vmem [shape: f32[784,10], index: 1, kind: input, shape index: {}]
  %s2 = inlined_call_operand.vmem [shape: f32[1,10], index: 2, kind: input, shape index: {}]
  %s3 = inlined_call_operand.hbm [shape: f32[2,10], index: 3, kind: output, shape index: {}]
  %s4 = sld [smem:[#allocation0]]
  $region22: #{tpu_custom_call.1} parent=0
    _
  %s6 = ssub.s32 1, %s4
  %s7 = scalar_select 0, %s6, %s4
  $region1: #{tpu_custom_call.1} parent=0
    #allocation2 [shape = 'u8[1024]{0}', space=vmem, size = 0x400, scoped, tag = 'output window, operand 0, single buffered']
    #allocation3 [shape = 's32[1]{0}', space=sflag, size = 0x4, scoped, tag = 'scoped memory for tpu_custom_call.1']
    %8 = vsyncpa [#allocation3], 0
    // Predicated region
    $region2: #{tpu_custom_call.1} parent=1 // pred_check
      _
    $region3: #{tpu_custom_call.1} parent=1 // pred_check_branch
      %10 = sbr.rel (0) target = $region5
    $region4: #{tpu_custom_call.1} parent=1 // pred_region
      _
    $region5: #{tpu_custom_call.1} parent=1 // pred_fallthru
      _
    // Predicated region
    $region6: #{tpu_custom_call.1} parent=1 // pred_check
      _
    $region7: #{tpu_custom_call.1} parent=1 // pred_check_branch
      %12 = sbr.rel (0) target = $region9
    $region8: #{tpu_custom_call.1} parent=1 // pred_region
      _
    $region9: #{tpu_custom_call.1} parent=1 // pred_fallthru
      _
    // Predicated region
    $region10: #{tpu_custom_call.1} parent=1 // pred_check
      _
    $region11: #{tpu_custom_call.1} parent=1 // pred_check_branch
      %14 = sbr.rel (0) target = $region13
    $region12: #{tpu_custom_call.1} parent=1 // pred_region
      _
    $region13: #{tpu_custom_call.1} parent=1 // pred_fallthru
      _
    %v16 = vld [vmem:[%s0] sm:$0xff]
    %v17 = vld [vmem:[%s0 + $0x8] sm:$0x3f]
    %v20 = vcombine.high %v16, %v16
    %v22 = vunpack.c.l.s4 1983009808
    %v23 = vunpack.c.0.s8 %v22
    %v24 = vlaneseq
    %v25 = vshrl.u32 %v24, 7
    %v26 = vsub.s32 %v23, %v25
    %v27 = vrot.slane %v16, %v26
    %v29 = vunpack.c.l.s4 1983009808
    %v30 = vunpack.c.0.s8 %v29
    %v31 = vlaneseq
    %v32 = vshrl.u32 %v31, 7
    %v33 = vsub.s32 %v30, %v32
    %v34 = vrot.slane %v20, %v33
    %v35 = vcombine.high %v27, %v27
    %v36 = vcombine.high %v34, %v34
    %v37 = vcombine.high %v17, %v17
    %v39 = vunpack.c.l.s4 1983009808
    %v40 = vunpack.c.0.s8 %v39
    %v41 = vlaneseq
    %v42 = vshrl.u32 %v41, 7
    %v43 = vsub.s32 %v40, %v42
    %v44 = vrot.slane %v17, %v43
    %v46 = vunpack.c.l.s4 1983009808
    %v47 = vunpack.c.0.s8 %v46
    %v48 = vlaneseq
    %v49 = vshrl.u32 %v48, 7
    %v50 = vsub.s32 %v47, %v49
    %v51 = vrot.slane %v37, %v50
    %v52 = vcombine.high %v44, %v44
    %v60 = vpack.c.bf16 %v27, %v27
    %v61 = vpack.c.bf16 %v35, %v35
    %v62 = vpack.c.bf16 %v34, %v34
    %v63 = vpack.c.bf16 %v36, %v36
    %v64 = vpack.c.bf16 %v44, %v44
    %v65 = vpack.c.bf16 %v52, %v52
    %v66 = vpack.c.bf16 %v51, %v51
    %v67 = vld [vmem:[%s1] sm:$0xff]
    %v68 = vld [vmem:[%s1 + $0x8] sm:$0xff]
    %v69 = vld [vmem:[%s1 + $0x10] sm:$0xff]
    %v70 = vld [vmem:[%s1 + $0x18] sm:$0xff]
    %v71 = vld [vmem:[%s1 + $0x20] sm:$0xff]
    %v72 = vld [vmem:[%s1 + $0x28] sm:$0xff]
    %v73 = vld [vmem:[%s1 + $0x30] sm:$0xff]
    %v74 = vld [vmem:[%s1 + $0x38] sm:$0xff]
    %v75 = vld [vmem:[%s1 + $0x40] sm:$0xff]
    %v76 = vld [vmem:[%s1 + $0x48] sm:$0xff]
    %v77 = vld [vmem:[%s1 + $0x50] sm:$0xff]
    %v78 = vld [vmem:[%s1 + $0x58] sm:$0xff]
    %v79 = vld [vmem:[%s1 + $0x60] sm:$0xff]
    %v80 = vld [vmem:[%s1 + $0x68] sm:$0xff]
    %v81 = vld [vmem:[%s1 + $0x70] sm:$0xff]
    %v82 = vld [vmem:[%s1 + $0x78] sm:$0xff]
    %v83 = vld [vmem:[%s1 + $0x80] sm:$0xff]
    %v84 = vld [vmem:[%s1 + $0x88] sm:$0xff]
    %v85 = vld [vmem:[%s1 + $0x90] sm:$0xff]
    %v86 = vld [vmem:[%s1 + $0x98] sm:$0xff]
    %v87 = vld [vmem:[%s1 + $0xa0] sm:$0xff]
    %v88 = vld [vmem:[%s1 + $0xa8] sm:$0xff]
    %v89 = vld [vmem:[%s1 + $0xb0] sm:$0xff]
    %v90 = vld [vmem:[%s1 + $0xb8] sm:$0xff]
    %v91 = vld [vmem:[%s1 + $0xc0] sm:$0xff]
    %v92 = vld [vmem:[%s1 + $0xc8] sm:$0xff]
    %v93 = vld [vmem:[%s1 + $0xd0] sm:$0xff]
    %v94 = vld [vmem:[%s1 + $0xd8] sm:$0xff]
    %v95 = vld [vmem:[%s1 + $0xe0] sm:$0xff]
    %v96 = vld [vmem:[%s1 + $0xe8] sm:$0xff]
    %v97 = vld [vmem:[%s1 + $0xf0] sm:$0xff]
    %v98 = vld [vmem:[%s1 + $0xf8] sm:$0xff]
    %v99 = vld [vmem:[%s1 + $0x100] sm:$0xff]
    %v100 = vld [vmem:[%s1 + $0x108] sm:$0xff]
    %v101 = vld [vmem:[%s1 + $0x110] sm:$0xff]
    %v102 = vld [vmem:[%s1 + $0x118] sm:$0xff]
    %v103 = vld [vmem:[%s1 + $0x120] sm:$0xff]
    %v104 = vld [vmem:[%s1 + $0x128] sm:$0xff]
    %v105 = vld [vmem:[%s1 + $0x130] sm:$0xff]
    %v106 = vld [vmem:[%s1 + $0x138] sm:$0xff]
    %v107 = vld [vmem:[%s1 + $0x140] sm:$0xff]
    %v108 = vld [vmem:[%s1 + $0x148] sm:$0xff]
    %v109 = vld [vmem:[%s1 + $0x150] sm:$0xff]
    %v110 = vld [vmem:[%s1 + $0x158] sm:$0xff]
    %v111 = vld [vmem:[%s1 + $0x160] sm:$0xff]
    %v112 = vld [vmem:[%s1 + $0x168] sm:$0xff]
    %v113 = vld [vmem:[%s1 + $0x170] sm:$0xff]
    %v114 = vld [vmem:[%s1 + $0x178] sm:$0xff]
    %v115 = vld [vmem:[%s1 + $0x180] sm:$0xff]
    %v116 = vld [vmem:[%s1 + $0x188] sm:$0xff]
    %v117 = vld [vmem:[%s1 + $0x190] sm:$0xff]
    %v118 = vld [vmem:[%s1 + $0x198] sm:$0xff]
    %v119 = vld [vmem:[%s1 + $0x1a0] sm:$0xff]
    %v120 = vld [vmem:[%s1 + $0x1a8] sm:$0xff]
    %v121 = vld [vmem:[%s1 + $0x1b0] sm:$0xff]
    %v122 = vld [vmem:[%s1 + $0x1b8] sm:$0xff]
    %v123 = vld [vmem:[%s1 + $0x1c0] sm:$0xff]
    %v124 = vld [vmem:[%s1 + $0x1c8] sm:$0xff]
    %v125 = vld [vmem:[%s1 + $0x1d0] sm:$0xff]
    %v126 = vld [vmem:[%s1 + $0x1d8] sm:$0xff]
    %v127 = vld [vmem:[%s1 + $0x1e0] sm:$0xff]
    %v128 = vld [vmem:[%s1 + $0x1e8] sm:$0xff]
    %v129 = vld [vmem:[%s1 + $0x1f0] sm:$0xff]
    %v130 = vld [vmem:[%s1 + $0x1f8] sm:$0xff]
    %v131 = vld [vmem:[%s1 + $0x200] sm:$0xff]
    %v132 = vld [vmem:[%s1 + $0x208] sm:$0xff]
    %v133 = vld [vmem:[%s1 + $0x210] sm:$0xff]
    %v134 = vld [vmem:[%s1 + $0x218] sm:$0xff]
    %v135 = vld [vmem:[%s1 + $0x220] sm:$0xff]
    %v136 = vld [vmem:[%s1 + $0x228] sm:$0xff]
    %v137 = vld [vmem:[%s1 + $0x230] sm:$0xff]
    %v138 = vld [vmem:[%s1 + $0x238] sm:$0xff]
    %v139 = vld [vmem:[%s1 + $0x240] sm:$0xff]
    %v140 = vld [vmem:[%s1 + $0x248] sm:$0xff]
    %v141 = vld [vmem:[%s1 + $0x250] sm:$0xff]
    %v142 = vld [vmem:[%s1 + $0x258] sm:$0xff]
    %v143 = vld [vmem:[%s1 + $0x260] sm:$0xff]
    %v144 = vld [vmem:[%s1 + $0x268] sm:$0xff]
    %v145 = vld [vmem:[%s1 + $0x270] sm:$0xff]
    %v146 = vld [vmem:[%s1 + $0x278] sm:$0xff]
    %v147 = vld [vmem:[%s1 + $0x280] sm:$0xff]
    %v148 = vld [vmem:[%s1 + $0x288] sm:$0xff]
    %v149 = vld [vmem:[%s1 + $0x290] sm:$0xff]
    %v150 = vld [vmem:[%s1 + $0x298] sm:$0xff]
    %v151 = vld [vmem:[%s1 + $0x2a0] sm:$0xff]
    %v152 = vld [vmem:[%s1 + $0x2a8] sm:$0xff]
    %v153 = vld [vmem:[%s1 + $0x2b0] sm:$0xff]
    %v154 = vld [vmem:[%s1 + $0x2b8] sm:$0xff]
    %v155 = vld [vmem:[%s1 + $0x2c0] sm:$0xff]
    %v156 = vld [vmem:[%s1 + $0x2c8] sm:$0xff]
    %v157 = vld [vmem:[%s1 + $0x2d0] sm:$0xff]
    %v158 = vld [vmem:[%s1 + $0x2d8] sm:$0xff]
    %v159 = vld [vmem:[%s1 + $0x2e0] sm:$0xff]
    %v160 = vld [vmem:[%s1 + $0x2e8] sm:$0xff]
    %v161 = vld [vmem:[%s1 + $0x2f0] sm:$0xff]
    %v162 = vld [vmem:[%s1 + $0x2f8] sm:$0xff]
    %v163 = vld [vmem:[%s1 + $0x300] sm:$0xff]
    %v164 = vld [vmem:[%s1 + $0x308] sm:$0xff]
    %v165 = vpack.c.bf16 %v68, %v67
    %v166 = vpack.c.bf16 %v70, %v69
    %v167 = vpack.c.bf16 %v72, %v71
    %v168 = vpack.c.bf16 %v74, %v73
    %v169 = vpack.c.bf16 %v76, %v75
    %v170 = vpack.c.bf16 %v78, %v77
    %v171 = vpack.c.bf16 %v80, %v79
    %v172 = vpack.c.bf16 %v82, %v81
    %v173 = vpack.c.bf16 %v84, %v83
    %v174 = vpack.c.bf16 %v86, %v85
    %v175 = vpack.c.bf16 %v88, %v87
    %v176 = vpack.c.bf16 %v90, %v89
    %v177 = vpack.c.bf16 %v92, %v91
    %v178 = vpack.c.bf16 %v94, %v93
    %v179 = vpack.c.bf16 %v96, %v95
    %v180 = vpack.c.bf16 %v98, %v97
    %v181 = vpack.c.bf16 %v100, %v99
    %v182 = vpack.c.bf16 %v102, %v101
    %v183 = vpack.c.bf16 %v104, %v103
    %v184 = vpack.c.bf16 %v106, %v105
    %v185 = vpack.c.bf16 %v108, %v107
    %v186 = vpack.c.bf16 %v110, %v109
    %v187 = vpack.c.bf16 %v112, %v111
    %v188 = vpack.c.bf16 %v114, %v113
    %v189 = vpack.c.bf16 %v116, %v115
    %v190 = vpack.c.bf16 %v118, %v117
    %v191 = vpack.c.bf16 %v120, %v119
    %v192 = vpack.c.bf16 %v122, %v121
    %v193 = vpack.c.bf16 %v124, %v123
    %v194 = vpack.c.bf16 %v126, %v125
    %v195 = vpack.c.bf16 %v128, %v127
    %v196 = vpack.c.bf16 %v130, %v129
    %v197 = vpack.c.bf16 %v132, %v131
    %v198 = vpack.c.bf16 %v134, %v133
    %v199 = vpack.c.bf16 %v136, %v135
    %v200 = vpack.c.bf16 %v138, %v137
    %v201 = vpack.c.bf16 %v140, %v139
    %v202 = vpack.c.bf16 %v142, %v141
    %v203 = vpack.c.bf16 %v144, %v143
    %v204 = vpack.c.bf16 %v146, %v145
    %v205 = vpack.c.bf16 %v148, %v147
    %v206 = vpack.c.bf16 %v150, %v149
    %v207 = vpack.c.bf16 %v152, %v151
    %v208 = vpack.c.bf16 %v154, %v153
    %v209 = vpack.c.bf16 %v156, %v155
    %v210 = vpack.c.bf16 %v158, %v157
    %v211 = vpack.c.bf16 %v160, %v159
    %v212 = vpack.c.bf16 %v162, %v161
    %v213 = vpack.c.bf16 %v164, %v163
    %v214 = vld [vmem:[%s2] sm:$0x1]
    %v216 = vlaneseq
    %v217 = vshrl.u32 %v216, 7
    %v218 = vsub.s32 0, %v217
    %v219 = vrot.slane %v214, %v218
    %vm221 = vcmask 130048
    %v223 = vsel %vm221, %v66, 0
    %225 = vmatprep.subr.bf16.mxu0 0
    %226 = vmatpush1.bf16.msra.mxu0 %v165
    %227 = vmatprep.subr.bf16.mxu0 0
    %228 = vmatpush1.bf16.msra.mxu0 %v166
    %229 = vmatprep.subr.bf16.mxu0 0
    %230 = vmatpush1.bf16.msra.mxu0 %v167
    %231 = vmatprep.subr.bf16.mxu0 0
    %232 = vmatpush1.bf16.msra.mxu0 %v168
    %233 = vmatprep.subr.bf16.mxu0 0
    %234 = vmatpush1.bf16.msra.mxu0 %v169
    %235 = vmatprep.subr.bf16.mxu0 0
    %236 = vmatpush1.bf16.msra.mxu0 %v170
    %237 = vmatprep.subr.bf16.mxu0 0
    %238 = vmatpush1.bf16.msra.mxu0 %v171
    %239 = vmatprep.subr.bf16.mxu0 0
    %240 = vmatpush1.bf16.msra.mxu0 %v172
    %241 = vmatprep.subr.bf16.mxu0 0
    %242 = vmatpush1.bf16.msra.mxu0 %v173
    %243 = vmatprep.subr.bf16.mxu0 0
    %244 = vmatpush1.bf16.msra.mxu0 %v174
    %245 = vmatprep.subr.bf16.mxu0 0
    %246 = vmatpush1.bf16.msra.mxu0 %v175
    %247 = vmatprep.subr.bf16.mxu0 0
    %248 = vmatpush1.bf16.msra.mxu0 %v176
    %249 = vmatprep.subr.bf16.mxu0 0
    %250 = vmatpush1.bf16.msra.mxu0 %v177
    %251 = vmatprep.subr.bf16.mxu0 0
    %252 = vmatpush1.bf16.msra.mxu0 %v178
    %253 = vmatprep.subr.bf16.mxu0 0
    %254 = vmatpush1.bf16.msra.mxu0 %v179
    %255 = vmatprep.subr.bf16.mxu0 0
    %256 = vmatpush1.bf16.msra.mxu0 %v180
    %257 = vmatprep.mubr.bf16.mxu0 %v61
    %258 = vmatmul.mubr.bf16.gmra.mrb[0].mxu0 %v60
    %v259 = vpop.f32.mrb[0].mxu0
    %v260 = vadd.f32 %v219, %v259
    %v261 = vpop.f32.mrb[0].mxu0
    %v262 = vpop.f32.mrb[0].mxu0
    %v263 = vpop.f32.mrb[0].mxu0
    %264 = vdwg.mxu0
    %265 = vmatprep.subr.bf16.mxu0 0
    %266 = vmatpush1.bf16.msra.mxu0 %v181
    %267 = vmatprep.subr.bf16.mxu0 0
    %268 = vmatpush1.bf16.msra.mxu0 %v182
    %269 = vmatprep.subr.bf16.mxu0 0
    %270 = vmatpush1.bf16.msra.mxu0 %v183
    %271 = vmatprep.subr.bf16.mxu0 0
    %272 = vmatpush1.bf16.msra.mxu0 %v184
    %273 = vmatprep.subr.bf16.mxu0 0
    %274 = vmatpush1.bf16.msra.mxu0 %v185
    %275 = vmatprep.subr.bf16.mxu0 0
    %276 = vmatpush1.bf16.msra.mxu0 %v186
    %277 = vmatprep.subr.bf16.mxu0 0
    %278 = vmatpush1.bf16.msra.mxu0 %v187
    %279 = vmatprep.subr.bf16.mxu0 0
    %280 = vmatpush1.bf16.msra.mxu0 %v188
    %281 = vmatprep.subr.bf16.mxu0 0
    %282 = vmatpush1.bf16.msra.mxu0 %v189
    %283 = vmatprep.subr.bf16.mxu0 0
    %284 = vmatpush1.bf16.msra.mxu0 %v190
    %285 = vmatprep.subr.bf16.mxu0 0
    %286 = vmatpush1.bf16.msra.mxu0 %v191
    %287 = vmatprep.subr.bf16.mxu0 0
    %288 = vmatpush1.bf16.msra.mxu0 %v192
    %289 = vmatprep.subr.bf16.mxu0 0
    %290 = vmatpush1.bf16.msra.mxu0 %v193
    %291 = vmatprep.subr.bf16.mxu0 0
    %292 = vmatpush1.bf16.msra.mxu0 %v194
    %293 = vmatprep.subr.bf16.mxu0 0
    %294 = vmatpush1.bf16.msra.mxu0 %v195
    %295 = vmatprep.subr.bf16.mxu0 0
    %296 = vmatpush1.bf16.msra.mxu0 %v196
    %297 = vmatprep.mubr.bf16.mxu0 %v63
    %298 = vmatmul.mubr.bf16.gmra.mrb[0].mxu0 %v62
    %v299 = vpop.f32.mrb[0].mxu0
    %v300 = vadd.f32 %v260, %v299
    %v301 = vpop.f32.mrb[0].mxu0
    %v302 = vpop.f32.mrb[0].mxu0
    %v303 = vpop.f32.mrb[0].mxu0
    %304 = vdwg.mxu0
    %305 = vmatprep.subr.bf16.mxu0 0
    %306 = vmatpush1.bf16.msra.mxu0 %v197
    %307 = vmatprep.subr.bf16.mxu0 0
    %308 = vmatpush1.bf16.msra.mxu0 %v198
    %309 = vmatprep.subr.bf16.mxu0 0
    %310 = vmatpush1.bf16.msra.mxu0 %v199
    %311 = vmatprep.subr.bf16.mxu0 0
    %312 = vmatpush1.bf16.msra.mxu0 %v200
    %313 = vmatprep.subr.bf16.mxu0 0
    %314 = vmatpush1.bf16.msra.mxu0 %v201
    %315 = vmatprep.subr.bf16.mxu0 0
    %316 = vmatpush1.bf16.msra.mxu0 %v202
    %317 = vmatprep.subr.bf16.mxu0 0
    %318 = vmatpush1.bf16.msra.mxu0 %v203
    %319 = vmatprep.subr.bf16.mxu0 0
    %320 = vmatpush1.bf16.msra.mxu0 %v204
    %321 = vmatprep.subr.bf16.mxu0 0
    %322 = vmatpush1.bf16.msra.mxu0 %v205
    %323 = vmatprep.subr.bf16.mxu0 0
    %324 = vmatpush1.bf16.msra.mxu0 %v206
    %325 = vmatprep.subr.bf16.mxu0 0
    %326 = vmatpush1.bf16.msra.mxu0 %v207
    %327 = vmatprep.subr.bf16.mxu0 0
    %328 = vmatpush1.bf16.msra.mxu0 %v208
    %329 = vmatprep.subr.bf16.mxu0 0
    %330 = vmatpush1.bf16.msra.mxu0 %v209
    %331 = vmatprep.subr.bf16.mxu0 0
    %332 = vmatpush1.bf16.msra.mxu0 %v210
    %333 = vmatprep.subr.bf16.mxu0 0
    %334 = vmatpush1.bf16.msra.mxu0 %v211
    %335 = vmatprep.subr.bf16.mxu0 0
    %336 = vmatpush1.bf16.msra.mxu0 %v212
    %337 = vmatprep.mubr.bf16.mxu0 %v65
    %338 = vmatmul.mubr.bf16.gmra.mrb[0].mxu0 %v64
    %v339 = vpop.f32.mrb[0].mxu0
    %v340 = vadd.f32 %v300, %v339
    %v341 = vpop.f32.mrb[0].mxu0
    %v342 = vpop.f32.mrb[0].mxu0
    %v343 = vpop.f32.mrb[0].mxu0
    %344 = vdwg.mxu0
    %345 = vmatprep.subr.bf16.mxu0 0
    %346 = vmatpush1.bf16.msra.mxu0 %v213
    %347 = vmatprep.subr.bf16.mxu0 0
    %348 = vmatpush1.bf16.msra.mxu0 0
    %349 = vmatprep.subr.bf16.mxu0 0
    %350 = vmatpush1.bf16.msra.mxu0 0
    %351 = vmatprep.subr.bf16.mxu0 0
    %352 = vmatpush1.bf16.msra.mxu0 0
    %353 = vmatprep.subr.bf16.mxu0 0
    %354 = vmatpush1.bf16.msra.mxu0 0
    %355 = vmatprep.subr.bf16.mxu0 0
    %356 = vmatpush1.bf16.msra.mxu0 0
    %357 = vmatprep.subr.bf16.mxu0 0
    %358 = vmatpush1.bf16.msra.mxu0 0
    %359 = vmatprep.subr.bf16.mxu0 0
    %360 = vmatpush1.bf16.msra.mxu0 0
    %361 = vmatprep.subr.bf16.mxu0 0
    %362 = vmatpush1.bf16.msra.mxu0 0
    %363 = vmatprep.subr.bf16.mxu0 0
    %364 = vmatpush1.bf16.msra.mxu0 0
    %365 = vmatprep.subr.bf16.mxu0 0
    %366 = vmatpush1.bf16.msra.mxu0 0
    %367 = vmatprep.subr.bf16.mxu0 0
    %368 = vmatpush1.bf16.msra.mxu0 0
    %369 = vmatprep.subr.bf16.mxu0 0
    %370 = vmatpush1.bf16.msra.mxu0 0
    %371 = vmatprep.subr.bf16.mxu0 0
    %372 = vmatpush1.bf16.msra.mxu0 0
    %373 = vmatprep.subr.bf16.mxu0 0
    %374 = vmatpush1.bf16.msra.mxu0 0
    %375 = vmatprep.subr.bf16.mxu0 0
    %376 = vmatpush1.bf16.msra.mxu0 0
    %377 = vmatprep.mubr.bf16.mxu0 0
    %378 = vmatmul.mubr.bf16.gmra.mrb[0].mxu0 %v223
    %v379 = vpop.f32.mrb[0].mxu0
    %v380 = vadd.f32 %v340, %v379
    %v381 = vpop.f32.mrb[0].mxu0
    %v382 = vpop.f32.mrb[0].mxu0
    %v383 = vpop.f32.mrb[0].mxu0
    %384 = vdwg.mxu0
    %vm385 = vcmask 74752
    %386 = vst.msk [vmem:[#allocation2] sm:$0x3] %vm385, %v380
    // Predicated region
    $region14: #{tpu_custom_call.1} parent=1 // pred_check
      _
    $region15: #{tpu_custom_call.1} parent=1 // pred_check_branch
      %388 = sbr.rel (0) target = $region17
    $region16: #{tpu_custom_call.1} parent=1 // pred_region
      %s390 = ssub.s32 32, 32
      %391 = vsyncadd [#allocation3], %s390
      %s393 = sshll.u32 [#allocation2], 4
      %s394 = int_to_ptr.vmem [resolvable:$true] %s393
      %396 = dma.vmem_to_hbm [thread:$0]  %s394, 32, %s3, [#allocation3]
    $region17: #{tpu_custom_call.1} parent=1 // pred_fallthru
      _
    // Predicated region
    $region18: #{tpu_custom_call.1} parent=1 // pred_check
      _
    $region19: #{tpu_custom_call.1} parent=1 // pred_check_branch
      %398 = sbr.rel (0) target = $region21
    $region20: #{tpu_custom_call.1} parent=1 // pred_region
      %399 = dma.done [#allocation3], 32
    $region21: #{tpu_custom_call.1} parent=1 // pred_fallthru
      _
    %400 = vsyncpa [#allocation3], 1

</llo_original>
